<compile_context>
chip_gen: v5e
topology: v5e:2x2
jax: 0.10.0
libtpu: 0.0.40
codegen_flags: <defaults>
</compile_context>

<pallas_src>
import jax
import jax.numpy as jnp
from jax.experimental import pallas as pl
from jax.experimental.pallas import tpu as pltpu


# ----------------------------------------------------------------------------
# Pallas kernel: per-pixel attention gate, channels-first, pixels in lanes.
#   a      = relu(Wg @ gate + Wx @ skip + (bg + bx))      (n_coef, TP)
#   psi    = sigmoid(Wp @ a + bp)                         (1, TP)
#   out    = skip * psi                                   (F_l, TP)
# ----------------------------------------------------------------------------
def _attention_kernel(gate_ref, skip_ref, wg_ref, wx_ref, wp_ref,
                      bgx_ref, bp_ref, out_ref):
    g = gate_ref[...].astype(jnp.float32)          # (F_g, TP)
    s = skip_ref[...].astype(jnp.float32)          # (F_l, TP)

    a = jnp.dot(wg_ref[...], g, preferred_element_type=jnp.float32)
    a = a + jnp.dot(wx_ref[...], s, preferred_element_type=jnp.float32)
    a = jnp.maximum(a + bgx_ref[...], 0.0)         # ReLU(g1 + x1)

    logits = jnp.dot(wp_ref[...], a, preferred_element_type=jnp.float32)
    psi = jax.nn.sigmoid(logits + bp_ref[...])     # (1, TP)

    out_ref[...] = (s * psi).astype(out_ref.dtype)


def _fold_bn(w, b, gamma, beta, mean, var, eps=1e-5):
    """Fold inference-mode BatchNorm into a 1x1 conv (w: (Cin, Cout), b: (Cout,))."""
    scale = gamma / jnp.sqrt(var + eps)
    return w * scale[None, :], (b - mean) * scale + beta


def _pad_or_crop_to(x, H, W):
    """PyTorch F.pad semantics on the spatial dims (negative pads crop)."""
    _, _, h, w = x.shape
    dY, dX = H - h, W - w
    cfg = [(0, 0, 0), (0, 0, 0),
           (dY // 2, dY - dY // 2, 0),
           (dX // 2, dX - dX // 2, 0)]
    return jax.lax.pad(x, jnp.zeros((), x.dtype), cfg)


def _round_up(x, m):
    return ((x + m - 1) // m) * m


def _sublane_multiple(dtype):
    # f32 -> 8 sublanes, bf16 -> 16, int8/fp8 -> 32 (packed vreg tiling).
    return 8 * (4 // jnp.dtype(dtype).itemsize)


def _tpu_generation_info():
    """(is_v7x, per-generation VMEM budget for the double-buffered tiles)."""
    try:
        kind = jax.devices()[0].device_kind.lower()
    except Exception:
        kind = ""
    is_v7 = ("v7" in kind) or ("tpu7" in kind)
    budget = (24 << 20) if is_v7 else (40 << 20)   # v7x: 64 MiB physical VMEM
    return is_v7, budget


def _pick_tile(HW, N, F_g, F_l, gate_dtype, skip_dtype, out_dtype):
    """VMEM-budgeted, generation-aware lane-tile size and vmem limit."""
    is_v7, budget = _tpu_generation_info()
    # VMEM bytes one pixel-lane occupies across the gate + skip input blocks
    # and the output block, including sublane padding of small channel counts.
    per_lane = (
        _round_up(F_g, _sublane_multiple(gate_dtype)) * jnp.dtype(gate_dtype).itemsize
        + _round_up(F_l, _sublane_multiple(skip_dtype)) * jnp.dtype(skip_dtype).itemsize
        + _round_up(F_l, _sublane_multiple(out_dtype)) * jnp.dtype(out_dtype).itemsize)

    tp = (budget // (2 * per_lane)) // 128 * 128          # double-buffered
    tp = max(tp, 128)
    if tp >= HW:
        tp = HW                      # whole image per step (block dim == array dim)
    n_tiles = pl.cdiv(HW, tp)        # ragged last block handled by Pallas

    # v7x has 2 TensorCores: keep the parallel grid at >= 2 steps.
    if is_v7 and N * n_tiles < 2 and HW >= 256:
        tp = _round_up(pl.cdiv(HW, 2), 128)
        n_tiles = pl.cdiv(HW, tp)

    vmem_limit = int(max(2 * per_lane * tp + (8 << 20), 32 << 20))
    return tp, n_tiles, vmem_limit


@jax.jit
def attention_block(gate, skip, params):
    """gate: (N, F_g, Hg, Wg) NCHW; skip: (N, F_l, H, W) NCHW."""
    N, F_g, _, _ = gate.shape
    _, F_l, H, W = skip.shape

    # padder(): match gate's spatial size to skip's (pad or crop).
    gate = _pad_or_crop_to(gate, H, W)

    # Fold the three BatchNorms into the 1x1 convs, transpose to (Cout, Cin).
    wg, bg = _fold_bn(params["wg"], params["bg"], params["bn_g_gamma"],
                      params["bn_g_beta"], params["bn_g_mean"], params["bn_g_var"])
    wx, bx = _fold_bn(params["wx"], params["bx"], params["bn_x_gamma"],
                      params["bn_x_beta"], params["bn_x_mean"], params["bn_x_var"])
    wp, bp = _fold_bn(params["wp"], params["bp"], params["bn_p_gamma"],
                      params["bn_p_beta"], params["bn_p_mean"], params["bn_p_var"])
    n_coef = wg.shape[1]

    wgT = wg.T                                  # (n_coef, F_g)
    wxT = wx.T                                  # (n_coef, F_l)
    wpT = wp.T                                  # (1, n_coef)
    bgx = (bg + bx).reshape(n_coef, 1)          # combined gate+skip bias
    bp2 = bp.reshape(1, 1)

    # Free reshapes: keep channels-first, flatten spatial into the lane axis.
    HW = H * W
    gate3 = gate.reshape(N, F_g, HW)
    skip3 = skip.reshape(N, F_l, HW)

    tp, n_tiles, vmem_limit = _pick_tile(HW, N, F_g, F_l,
                                         gate.dtype, skip.dtype, skip.dtype)

    out3 = pl.pallas_call(
        _attention_kernel,
        out_shape=jax.ShapeDtypeStruct((N, F_l, HW), skip.dtype),
        grid=(N, n_tiles),
        in_specs=[
            pl.BlockSpec((None, F_g, tp), lambda n, p: (n, 0, p)),   # gate tile
            pl.BlockSpec((None, F_l, tp), lambda n, p: (n, 0, p)),   # skip tile
            pl.BlockSpec((n_coef, F_g), lambda n, p: (0, 0)),        # Wg^T
            pl.BlockSpec((n_coef, F_l), lambda n, p: (0, 0)),        # Wx^T
            pl.BlockSpec((1, n_coef), lambda n, p: (0, 0)),          # Wp^T
            pl.BlockSpec((n_coef, 1), lambda n, p: (0, 0)),          # bg + bx
            pl.BlockSpec((1, 1), lambda n, p: (0, 0)),               # bp
        ],
        out_specs=pl.BlockSpec((None, F_l, tp), lambda n, p: (n, 0, p)),
        compiler_params=pltpu.CompilerParams(
            dimension_semantics=("parallel", "parallel"),
            vmem_limit_bytes=vmem_limit),
    )(gate3, skip3, wgT, wxT, wpT, bgx, bp2)

    return out3.reshape(N, F_l, H, W)           # free reshape, no transpose


def init_params(key, F_g, F_l, n_coef):
    """Deterministic synthetic parameters matching the PyTorch module shapes.

    Conv weights are stored as (Cin, Cout) (i.e. 1x1 conv weights
    (Cout, Cin, 1, 1) transposed)."""
    ks = jax.random.split(key, 12)
    u = lambda k, shape, s=0.5: jax.random.uniform(k, shape, jnp.float32, -s, s)
    return {
        "wg": u(ks[0], (F_g, n_coef)),
        "bg": u(ks[1], (n_coef,)),
        "wx": u(ks[2], (F_l, n_coef)),
        "bx": u(ks[3], (n_coef,)),
        "wp": u(ks[4], (n_coef, 1)),
        "bp": u(ks[5], (1,)),
        # BatchNorm (inference) parameters / running stats.
        "bn_g_gamma": 1.0 + 0.1 * u(ks[6], (n_coef,)),
        "bn_g_beta": 0.1 * u(ks[7], (n_coef,)),
        "bn_g_mean": 0.1 * u(ks[8], (n_coef,)),
        "bn_g_var": jnp.ones((n_coef,), jnp.float32),
        "bn_x_gamma": 1.0 + 0.1 * u(ks[9], (n_coef,)),
        "bn_x_beta": 0.1 * u(ks[10], (n_coef,)),
        "bn_x_mean": 0.1 * u(ks[11], (n_coef,)),
        "bn_x_var": jnp.ones((n_coef,), jnp.float32),
        "bn_p_gamma": jnp.ones((1,), jnp.float32),
        "bn_p_beta": jnp.zeros((1,), jnp.float32),
        "bn_p_mean": jnp.zeros((1,), jnp.float32),
        "bn_p_var": jnp.ones((1,), jnp.float32),
    }


def _reference(gate, skip, params):
    """Pure-JAX reference of the same (inference-mode BN) forward pass."""
    _, _, H, W = skip.shape
    gate = _pad_or_crop_to(gate, H, W)
    wg, bg = _fold_bn(params["wg"], params["bg"], params["bn_g_gamma"],
                      params["bn_g_beta"], params["bn_g_mean"], params["bn_g_var"])
    wx, bx = _fold_bn(params["wx"], params["bx"], params["bn_x_gamma"],
                      params["bn_x_beta"], params["bn_x_mean"], params["bn_x_var"])
    wp, bp = _fold_bn(params["wp"], params["bp"], params["bn_p_gamma"],
                      params["bn_p_beta"], params["bn_p_mean"], params["bn_p_var"])
    g1 = jnp.einsum("nchw,ck->nkhw", gate, wg) + bg[None, :, None, None]
    x1 = jnp.einsum("nchw,ck->nkhw", skip, wx) + bx[None, :, None, None]
    a = jnp.maximum(g1 + x1, 0.0)
    psi = jax.nn.sigmoid(jnp.einsum("nkhw,ko->nohw", a, wp) + bp[None, :, None, None])
    return skip * psi


if __name__ == "__main__":
    key = jax.random.PRNGKey(0)
    k_gate, k_skip, k_params, k_gate2, k_skip2 = jax.random.split(key, 5)

    F_g, F_l, n_coef = 4, 4, 8
    N, H, W = 2, 16, 16

    # gate is slightly smaller spatially to exercise padder() (padding branch).
    gate = jax.random.normal(k_gate, (N, F_g, H - 2, W - 2), jnp.float32)
    skip = jax.random.normal(k_skip, (N, F_l, H, W), jnp.float32)
    params = init_params(k_params, F_g, F_l, n_coef)

    # --- f32 path -----------------------------------------------------------
    out = jax.block_until_ready(attention_block(gate, skip, params))
    ref = _reference(gate, skip, params)
    assert out.shape == skip.shape, (out.shape, skip.shape)
    err = float(jnp.max(jnp.abs(out - ref)))
    assert jnp.allclose(out, ref, atol=1e-5, rtol=1e-5), err

    # --- bf16 I/O path (halves HBM traffic; compute stays f32 in-kernel) ----
    out_bf16 = jax.block_until_ready(
        attention_block(gate.astype(jnp.bfloat16), skip.astype(jnp.bfloat16), params))
    assert out_bf16.dtype == jnp.bfloat16
    err_bf16 = float(jnp.max(jnp.abs(out_bf16.astype(jnp.float32) - ref)))
    assert err_bf16 < 0.1, err_bf16

    # --- odd spatial size + crop branch of padder(), no wrapper pad/slice ---
    gate2 = jax.random.normal(k_gate2, (N, F_g, 17, 15), jnp.float32)   # cropped
    skip2 = jax.random.normal(k_skip2, (N, F_l, 15, 13), jnp.float32)   # HW = 195
    out2 = jax.block_until_ready(attention_block(gate2, skip2, params))
    ref2 = _reference(gate2, skip2, params)
    err2 = float(jnp.max(jnp.abs(out2 - ref2)))
    assert out2.shape == skip2.shape and jnp.allclose(out2, ref2, atol=1e-5, rtol=1e-5), err2

    print("KERNEL_OK")
</pallas_src>

<mosaic_0001>
module attributes {stable_mosaic.version = 11 : i64} {
  func.func @_attention_kernel(%arg0: i32, %arg1: i32, %arg2: memref<1x4x256xf32, #tpu.memory_space<vmem>>, %arg3: memref<1x4x256xf32, #tpu.memory_space<vmem>>, %arg4: memref<8x4xf32, #tpu.memory_space<vmem>>, %arg5: memref<8x4xf32, #tpu.memory_space<vmem>>, %arg6: memref<1x8xf32, #tpu.memory_space<vmem>>, %arg7: memref<8x1xf32, #tpu.memory_space<vmem>>, %arg8: memref<1x1xf32, #tpu.memory_space<vmem>>, %arg9: memref<1x4x256xf32, #tpu.memory_space<vmem>>) attributes {dimension_semantics = [#tpu.dimension_semantics<parallel>, #tpu.dimension_semantics<parallel>], iteration_bounds = array<i64: 2, 1>, scalar_prefetch = 0 : i64, scratch_operands = 0 : i64, tpu.core_type = #tpu.core_type<tc>, window_params = [{transform_indices = @transform_0, window_bounds = array<i64: 1, 4, 256>}, {transform_indices = @transform_1, window_bounds = array<i64: 1, 4, 256>}, {pipeline_mode = #tpu.pipeline_mode<synchronous>, transform_indices = @transform_2, window_bounds = array<i64: 8, 4>}, {pipeline_mode = #tpu.pipeline_mode<synchronous>, transform_indices = @transform_3, window_bounds = array<i64: 8, 4>}, {pipeline_mode = #tpu.pipeline_mode<synchronous>, transform_indices = @transform_4, window_bounds = array<i64: 1, 8>}, {pipeline_mode = #tpu.pipeline_mode<synchronous>, transform_indices = @transform_5, window_bounds = array<i64: 8, 1>}, {pipeline_mode = #tpu.pipeline_mode<synchronous>, transform_indices = @transform_6, window_bounds = array<i64: 1, 1>}, {transform_indices = @transform_7, window_bounds = array<i64: 1, 4, 256>}]} {
    %c0 = arith.constant 0 : index
    %c0_0 = arith.constant 0 : index
    %c0_1 = arith.constant 0 : index
    %0 = vector.load %arg2[%c0, %c0_0, %c0_1] : memref<1x4x256xf32, #tpu.memory_space<vmem>>, vector<1x4x256xf32>
    %1 = vector.shape_cast %0 : vector<1x4x256xf32> to vector<4x256xf32>
    %c0_2 = arith.constant 0 : index
    %c0_3 = arith.constant 0 : index
    %c0_4 = arith.constant 0 : index
    %2 = vector.load %arg3[%c0_2, %c0_3, %c0_4] : memref<1x4x256xf32, #tpu.memory_space<vmem>>, vector<1x4x256xf32>
    %3 = vector.shape_cast %2 : vector<1x4x256xf32> to vector<4x256xf32>
    %c0_5 = arith.constant 0 : index
    %c0_6 = arith.constant 0 : index
    %4 = vector.load %arg4[%c0_5, %c0_6] : memref<8x4xf32, #tpu.memory_space<vmem>>, vector<8x4xf32>
    %cst = arith.constant dense<0.000000e+00> : vector<8x256xf32>
    %5 = tpu.matmul %4, %1, %cst {dimension_numbers = #tpu.dot_dimension_numbers<[1], [0], [0], [1], [0, 0, 1, 1], [], []>} : vector<8x4xf32>, vector<4x256xf32>, vector<8x256xf32> -> vector<8x256xf32>
    %c0_7 = arith.constant 0 : index
    %c0_8 = arith.constant 0 : index
    %6 = vector.load %arg5[%c0_7, %c0_8] : memref<8x4xf32, #tpu.memory_space<vmem>>, vector<8x4xf32>
    %cst_9 = arith.constant dense<0.000000e+00> : vector<8x256xf32>
    %7 = tpu.matmul %6, %3, %cst_9 {dimension_numbers = #tpu.dot_dimension_numbers<[1], [0], [0], [1], [0, 0, 1, 1], [], []>} : vector<8x4xf32>, vector<4x256xf32>, vector<8x256xf32> -> vector<8x256xf32>
    %8 = arith.addf %5, %7 : vector<8x256xf32>
    %c0_10 = arith.constant 0 : index
    %c0_11 = arith.constant 0 : index
    %9 = vector.load %arg7[%c0_10, %c0_11] : memref<8x1xf32, #tpu.memory_space<vmem>>, vector<8x1xf32>
    %10 = vector.broadcast %9 : vector<8x1xf32> to vector<8x256xf32>
    %11 = arith.addf %8, %10 : vector<8x256xf32>
    %cst_12 = arith.constant 0.000000e+00 : f32
    %12 = vector.broadcast %cst_12 : f32 to vector<8x256xf32>
    %13 = arith.maximumf %11, %12 : vector<8x256xf32>
    %c0_13 = arith.constant 0 : index
    %c0_14 = arith.constant 0 : index
    %14 = vector.load %arg6[%c0_13, %c0_14] : memref<1x8xf32, #tpu.memory_space<vmem>>, vector<1x8xf32>
    %cst_15 = arith.constant dense<0.000000e+00> : vector<1x256xf32>
    %15 = tpu.matmul %14, %13, %cst_15 {dimension_numbers = #tpu.dot_dimension_numbers<[1], [0], [0], [1], [0, 0, 1, 1], [], []>} : vector<1x8xf32>, vector<8x256xf32>, vector<1x256xf32> -> vector<1x256xf32>
    %c0_16 = arith.constant 0 : index
    %c0_17 = arith.constant 0 : index
    %16 = vector.load %arg8[%c0_16, %c0_17] : memref<1x1xf32, #tpu.memory_space<vmem>>, vector<1x1xf32>
    %17 = vector.broadcast %16 : vector<1x1xf32> to vector<1x256xf32>
    %18 = arith.addf %15, %17 : vector<1x256xf32>
    %19 = arith.negf %18 : vector<1x256xf32>
    %20 = math.exp %19 : vector<1x256xf32>
    %cst_18 = arith.constant 1.000000e+00 : f32
    %21 = vector.broadcast %cst_18 : f32 to vector<1x256xf32>
    %22 = arith.addf %21, %20 : vector<1x256xf32>
    %23 = arith.divf %21, %22 : vector<1x256xf32>
    %24 = vector.broadcast %23 : vector<1x256xf32> to vector<4x256xf32>
    %25 = arith.mulf %3, %24 : vector<4x256xf32>
    %c0_19 = arith.constant 0 : index
    %c0_20 = arith.constant 0 : index
    %c0_21 = arith.constant 0 : index
    %26 = vector.load %arg9[%c0_19, %c0_20, %c0_21] : memref<1x4x256xf32, #tpu.memory_space<vmem>>, vector<1x4x256xf32>
    %27 = vector.shape_cast %26 : vector<1x4x256xf32> to vector<4x256xf32>
    %28 = vector.shape_cast %25 : vector<4x256xf32> to vector<1x4x256xf32>
    tpu.vector_store %arg9[%c0_19, %c0_20, %c0_21], %28 {strides = array<i32>} : memref<1x4x256xf32, #tpu.memory_space<vmem>>, vector<1x4x256xf32>,
    return
  }
  func.func @transform_0(%arg0: i32, %arg1: i32) -> (i32, i32, i32) {
    %c0_i32 = arith.constant 0 : i32
    %c0_i32_0 = arith.constant 0 : i32
    return %arg0, %c0_i32, %arg1 : i32, i32, i32
  }
  func.func @transform_1(%arg0: i32, %arg1: i32) -> (i32, i32, i32) {
    %c0_i32 = arith.constant 0 : i32
    %c0_i32_0 = arith.constant 0 : i32
    return %arg0, %c0_i32, %arg1 : i32, i32, i32
  }
  func.func @transform_2(%arg0: i32, %arg1: i32) -> (i32, i32) {
    %c0_i32 = arith.constant 0 : i32
    %c0_i32_0 = arith.constant 0 : i32
    %c0_i32_1 = arith.constant 0 : i32
    return %c0_i32, %c0_i32_0 : i32, i32
  }
  func.func @transform_3(%arg0: i32, %arg1: i32) -> (i32, i32) {
    %c0_i32 = arith.constant 0 : i32
    %c0_i32_0 = arith.constant 0 : i32
    %c0_i32_1 = arith.constant 0 : i32
    return %c0_i32, %c0_i32_0 : i32, i32
  }
  func.func @transform_4(%arg0: i32, %arg1: i32) -> (i32, i32) {
    %c0_i32 = arith.constant 0 : i32
    %c0_i32_0 = arith.constant 0 : i32
    %c0_i32_1 = arith.constant 0 : i32
    return %c0_i32, %c0_i32_0 : i32, i32
  }
  func.func @transform_5(%arg0: i32, %arg1: i32) -> (i32, i32) {
    %c0_i32 = arith.constant 0 : i32
    %c0_i32_0 = arith.constant 0 : i32
    %c0_i32_1 = arith.constant 0 : i32
    return %c0_i32, %c0_i32_0 : i32, i32
  }
  func.func @transform_6(%arg0: i32, %arg1: i32) -> (i32, i32) {
    %c0_i32 = arith.constant 0 : i32
    %c0_i32_0 = arith.constant 0 : i32
    %c0_i32_1 = arith.constant 0 : i32
    return %c0_i32, %c0_i32_0 : i32, i32
  }
  func.func @transform_7(%arg0: i32, %arg1: i32) -> (i32, i32, i32) {
    %c0_i32 = arith.constant 0 : i32
    %c0_i32_0 = arith.constant 0 : i32
    return %arg0, %c0_i32, %arg1 : i32, i32, i32
  }
}

</mosaic_0001>

<llo_original>
// kernel: attention_block.1
$region0: #{attention_block.1}
  #allocation0 [shape = 'u32[]', space=smem, size = 0x4, offset = 0x4, fixed_abs, tag = 'smem constant byte address 0x4 - core index']
  #allocation1 [shape = 'u32[72,128]{1,0:T(1,128)}', space=vmem, size = 0x9000, scoped, tag = 'internal scratch']
  #allocation2 [shape = 'f32[1,1]{1,0:T(1,128)S(1)}', space=vmem, size = 0x200, scoped, tag = 'scoped memory for attention_block.1']
  %s0 = inlined_call_operand.vmem [shape: f32[2,4,256], index: 0, kind: input, shape index: {}]
  %s1 = inlined_call_operand.vmem [shape: f32[2,4,256], index: 1, kind: input, shape index: {}]
  %s2 = inlined_call_operand.vmem [shape: f32[8,4], index: 2, kind: input, shape index: {}]
  %s3 = inlined_call_operand.vmem [shape: f32[8,4], index: 3, kind: input, shape index: {}]
  %s4 = inlined_call_operand.vmem [shape: f32[1,8], index: 4, kind: input, shape index: {}]
  %s5 = inlined_call_operand.vmem [shape: f32[8,1], index: 5, kind: input, shape index: {}]
  %s6 = inlined_call_operand.<no memory space> [shape: f32[1,1], index: 6, kind: input, shape index: {}]
  %s7 = inlined_call_operand.vmem [shape: f32[2,4,256], index: 7, kind: output, shape index: {}]
  %s8 = sld [smem:[#allocation0]]
  $region61: #{attention_block.1} parent=0
    _
  %s10 = ssub.s32 1, %s8
  %s11 = scalar_select 0, %s10, %s8
  %v12 = vstv %s6
  %13 = vst [vmem:[#allocation2] sm:$0x1] %v12
  loop: start=0, step=1, limit=4
  $region2: #{attention_block.1} parent=0 // loop_pre_header
    _
  $region3: #{attention_block.1} parent=0 // loop_header
    %s15 = sphi 0, %s19
    %p16 = scmp.ge.s32.totalorder %s15, 4
    %s22 = sphi 0, %s34
    %s23 = sphi 0, %s30
    %s24 = sphi 0, %s22
    %s25 = sphi 0, %s23
    %s26 = sphi 0, %s24
    %s27 = sphi 0, %s25
    %s39 = sphi 0, %s41
    %s42 = sphi 0, %s39
    %s43 = sphi 0, %s42
    %s59 = sphi 0, %s43
    %s67 = sphi 0, %s69
    %s70 = sphi 0, %s67
    %s71 = sphi 0, %s70
    %s87 = sphi 0, %s71
    %s91 = sphi 0, %s91
    %s93 = sphi 0, %s91
    %s94 = sphi 0, %s93
    %s108 = sphi 0, %s94
    %s112 = sphi 0, %s112
    %s114 = sphi 0, %s112
    %s115 = sphi 0, %s114
    %s129 = sphi 0, %s115
    %s133 = sphi 0, %s133
    %s135 = sphi 0, %s133
    %s136 = sphi 0, %s135
    %s150 = sphi 0, %s136
    %s154 = sphi 0, %s154
    %s156 = sphi 0, %s154
    %s157 = sphi 0, %s156
    %s171 = sphi 0, %s157
    %s175 = sphi 0, %s175
    %s177 = sphi 0, %s175
    %s178 = sphi 0, %s177
    %s192 = sphi 0, %s178
    %s200 = sphi 0, %s202
    %s203 = sphi 0, %s200
    %s204 = sphi 0, %s203
    %s220 = sphi 0, %s204
  $region4: #{attention_block.1} parent=0 // loop_header_branch
    %18 = sbr.rel (%p16) target = $region8
  $region5: #{attention_block.1} parent=0 // loop_body
    %s20 = ssub.s32 %s15, 1
    %s21 = ssub.s32 %s15, 2
    %s28 = sadd.s32 1, %s23
    %p29 = scmp.ge.s32.totalorder %s28, 1
    %s30 = scalar_select %p29, 0, %s28
    %s31 = sadd.s32 1, %s22
    %s32 = scalar_select %p29, %s31, %s22
    %p33 = scmp.ge.s32.totalorder %s32, 2
    %s34 = scalar_select %p33, 0, %s32
    %s35 = ssub.s32 %s22, %s34
    %s36 = ssub.s32 %s23, %s30
    %s37 = sor.u32 %s35, %s36
    %p38 = scmp.eq.s32.totalorder %s37, 0
    %s40 = sadd.s32 %s39, 1
    %s41 = scalar_select %p38, %s39, %s40
    %p44 = pneg %p38
    %p45 = scmp.eq.s32.totalorder %s15, 1
    %p46 = por %p44, %p45
    %p47 = scmp.ne.s32.totalorder %s39, %s42
    %p48 = scmp.eq.s32.totalorder %s15, 0
    %p49 = por %p47, %p48
    %p50 = scmp.ne.s32.totalorder %s39, %s42
    %p51 = scmp.eq.s32.totalorder %s20, 1
    %p52 = por %p50, %p51
    %p53 = scmp.ne.s32.totalorder %s42, %s43
    %p54 = scmp.eq.s32.totalorder %s20, 0
    %p55 = por %p53, %p54
    %p56 = scmp.ne.s32.totalorder %s42, %s43
    %p57 = scmp.eq.s32.totalorder %s21, 1
    %p58 = por %p56, %p57
    %p60 = scmp.ne.s32.totalorder %s43, %s59
    %p61 = scmp.eq.s32.totalorder %s21, 0
    %p62 = por %p60, %p61
    %s63 = ssub.s32 %s22, %s34
    %s64 = ssub.s32 %s23, %s30
    %s65 = sor.u32 %s63, %s64
    %p66 = scmp.eq.s32.totalorder %s65, 0
    %s68 = sadd.s32 %s67, 1
    %s69 = scalar_select %p66, %s67, %s68
    %p72 = pneg %p66
    %p73 = scmp.eq.s32.totalorder %s15, 1
    %p74 = por %p72, %p73
    %p75 = scmp.ne.s32.totalorder %s67, %s70
    %p76 = scmp.eq.s32.totalorder %s15, 0
    %p77 = por %p75, %p76
    %p78 = scmp.ne.s32.totalorder %s67, %s70
    %p79 = scmp.eq.s32.totalorder %s20, 1
    %p80 = por %p78, %p79
    %p81 = scmp.ne.s32.totalorder %s70, %s71
    %p82 = scmp.eq.s32.totalorder %s20, 0
    %p83 = por %p81, %p82
    %p84 = scmp.ne.s32.totalorder %s70, %s71
    %p85 = scmp.eq.s32.totalorder %s21, 1
    %p86 = por %p84, %p85
    %p88 = scmp.ne.s32.totalorder %s71, %s87
    %p89 = scmp.eq.s32.totalorder %s21, 0
    %p90 = por %p88, %p89
    %s92 = sadd.s32 %s91, 1
    %p95 = scmp.eq.s32.totalorder %s15, 1
    %p96 = scmp.ne.s32.totalorder %s91, %s93
    %p97 = scmp.eq.s32.totalorder %s15, 0
    %p98 = por %p96, %p97
    %p99 = scmp.ne.s32.totalorder %s91, %s93
    %p100 = scmp.eq.s32.totalorder %s20, 1
    %p101 = por %p99, %p100
    %p102 = scmp.ne.s32.totalorder %s93, %s94
    %p103 = scmp.eq.s32.totalorder %s20, 0
    %p104 = por %p102, %p103
    %p105 = scmp.ne.s32.totalorder %s93, %s94
    %p106 = scmp.eq.s32.totalorder %s21, 1
    %p107 = por %p105, %p106
    %p109 = scmp.ne.s32.totalorder %s94, %s108
    %p110 = scmp.eq.s32.totalorder %s21, 0
    %p111 = por %p109, %p110
    %s113 = sadd.s32 %s112, 1
    %p116 = scmp.eq.s32.totalorder %s15, 1
    %p117 = scmp.ne.s32.totalorder %s112, %s114
    %p118 = scmp.eq.s32.totalorder %s15, 0
    %p119 = por %p117, %p118
    %p120 = scmp.ne.s32.totalorder %s112, %s114
    %p121 = scmp.eq.s32.totalorder %s20, 1
    %p122 = por %p120, %p121
    %p123 = scmp.ne.s32.totalorder %s114, %s115
    %p124 = scmp.eq.s32.totalorder %s20, 0
    %p125 = por %p123, %p124
    %p126 = scmp.ne.s32.totalorder %s114, %s115
    %p127 = scmp.eq.s32.totalorder %s21, 1
    %p128 = por %p126, %p127
    %p130 = scmp.ne.s32.totalorder %s115, %s129
    %p131 = scmp.eq.s32.totalorder %s21, 0
    %p132 = por %p130, %p131
    %s134 = sadd.s32 %s133, 1
    %p137 = scmp.eq.s32.totalorder %s15, 1
    %p138 = scmp.ne.s32.totalorder %s133, %s135
    %p139 = scmp.eq.s32.totalorder %s15, 0
    %p140 = por %p138, %p139
    %p141 = scmp.ne.s32.totalorder %s133, %s135
    %p142 = scmp.eq.s32.totalorder %s20, 1
    %p143 = por %p141, %p142
    %p144 = scmp.ne.s32.totalorder %s135, %s136
    %p145 = scmp.eq.s32.totalorder %s20, 0
    %p146 = por %p144, %p145
    %p147 = scmp.ne.s32.totalorder %s135, %s136
    %p148 = scmp.eq.s32.totalorder %s21, 1
    %p149 = por %p147, %p148
    %p151 = scmp.ne.s32.totalorder %s136, %s150
    %p152 = scmp.eq.s32.totalorder %s21, 0
    %p153 = por %p151, %p152
    %s155 = sadd.s32 %s154, 1
    %p158 = scmp.eq.s32.totalorder %s15, 1
    %p159 = scmp.ne.s32.totalorder %s154, %s156
    %p160 = scmp.eq.s32.totalorder %s15, 0
    %p161 = por %p159, %p160
    %p162 = scmp.ne.s32.totalorder %s154, %s156
    %p163 = scmp.eq.s32.totalorder %s20, 1
    %p164 = por %p162, %p163
    %p165 = scmp.ne.s32.totalorder %s156, %s157
    %p166 = scmp.eq.s32.totalorder %s20, 0
    %p167 = por %p165, %p166
    %p168 = scmp.ne.s32.totalorder %s156, %s157
    %p169 = scmp.eq.s32.totalorder %s21, 1
    %p170 = por %p168, %p169
    %p172 = scmp.ne.s32.totalorder %s157, %s171
    %p173 = scmp.eq.s32.totalorder %s21, 0
    %p174 = por %p172, %p173
    %s176 = sadd.s32 %s175, 1
    %p179 = scmp.eq.s32.totalorder %s15, 1
    %p180 = scmp.ne.s32.totalorder %s175, %s177
    %p181 = scmp.eq.s32.totalorder %s15, 0
    %p182 = por %p180, %p181
    %p183 = scmp.ne.s32.totalorder %s175, %s177
    %p184 = scmp.eq.s32.totalorder %s20, 1
    %p185 = por %p183, %p184
    %p186 = scmp.ne.s32.totalorder %s177, %s178
    %p187 = scmp.eq.s32.totalorder %s20, 0
    %p188 = por %p186, %p187
    %p189 = scmp.ne.s32.totalorder %s177, %s178
    %p190 = scmp.eq.s32.totalorder %s21, 1
    %p191 = por %p189, %p190
    %p193 = scmp.ne.s32.totalorder %s178, %s192
    %p194 = scmp.eq.s32.totalorder %s21, 0
    %p195 = por %p193, %p194
    %s196 = ssub.s32 %s22, %s34
    %s197 = ssub.s32 %s23, %s30
    %s198 = sor.u32 %s196, %s197
    %p199 = scmp.eq.s32.totalorder %s198, 0
    %s201 = sadd.s32 %s200, 1
    %s202 = scalar_select %p199, %s200, %s201
    %p205 = pneg %p199
    %p206 = scmp.eq.s32.totalorder %s15, 1
    %p207 = por %p205, %p206
    %p208 = scmp.ne.s32.totalorder %s200, %s203
    %p209 = scmp.eq.s32.totalorder %s15, 0
    %p210 = por %p208, %p209
    %p211 = scmp.ne.s32.totalorder %s200, %s203
    %p212 = scmp.eq.s32.totalorder %s20, 1
    %p213 = por %p211, %p212
    %p214 = scmp.ne.s32.totalorder %s203, %s204
    %p215 = scmp.eq.s32.totalorder %s20, 0
    %p216 = por %p214, %p215
    %p217 = scmp.ne.s32.totalorder %s203, %s204
    %p218 = scmp.eq.s32.totalorder %s21, 1
    %p219 = por %p217, %p218
    %p221 = scmp.ne.s32.totalorder %s204, %s220
    %p222 = scmp.eq.s32.totalorder %s21, 0
    %p223 = por %p221, %p222
    %p224 = scmp.le.s32.totalorder 1, %s15
    %p225 = scmp.lt.s32.totalorder %s15, 3
    %p226 = pnand %p224, %p225
    %p227 = pneg %p226
    // Predicated region
    $region9: #{attention_block.1} parent=5 // pred_check
      _
    $region10: #{attention_block.1} parent=5 // pred_check_branch
      %229 = sbr.rel (%p226) target = $region12
    $region11: #{attention_block.1} parent=5 // pred_region
      %s230 = ssub.s32 %s15, 1
      // Predicated region
      $region13: #{attention_block.1} parent=11 // pred_check
        %p231 = pneg %p104
      $region14: #{attention_block.1} parent=11 // pred_check_branch
        %233 = sbr.rel (%p231) target = $region16
      $region15: #{attention_block.1} parent=11 // pred_region
        _
      $region16: #{attention_block.1} parent=11 // pred_fallthru
        _
      // Predicated region
      $region17: #{attention_block.1} parent=11 // pred_check
        %p234 = pneg %p125
      $region18: #{attention_block.1} parent=11 // pred_check_branch
        %236 = sbr.rel (%p234) target = $region20
      $region19: #{attention_block.1} parent=11 // pred_region
        _
      $region20: #{attention_block.1} parent=11 // pred_fallthru
        _
      // Predicated region
      $region21: #{attention_block.1} parent=11 // pred_check
        %p237 = pneg %p146
      $region22: #{attention_block.1} parent=11 // pred_check_branch
        %239 = sbr.rel (%p237) target = $region24
      $region23: #{attention_block.1} parent=11 // pred_region
        _
      $region24: #{attention_block.1} parent=11 // pred_fallthru
        _
      // Predicated region
      $region25: #{attention_block.1} parent=11 // pred_check
        %p240 = pneg %p167
      $region26: #{attention_block.1} parent=11 // pred_check_branch
        %242 = sbr.rel (%p240) target = $region28
      $region27: #{attention_block.1} parent=11 // pred_region
        _
      $region28: #{attention_block.1} parent=11 // pred_fallthru
        _
      // Predicated region
      $region29: #{attention_block.1} parent=11 // pred_check
        %p243 = pneg %p188
      $region30: #{attention_block.1} parent=11 // pred_check_branch
        %245 = sbr.rel (%p243) target = $region32
      $region31: #{attention_block.1} parent=11 // pred_region
        _
      $region32: #{attention_block.1} parent=11 // pred_fallthru
        _
    $region12: #{attention_block.1} parent=5 // pred_fallthru
      _
    %p246 = scmp.lt.s32.totalorder %s15, 2
    // Predicated region
    $region33: #{attention_block.1} parent=5 // pred_check
      %p247 = pneg %p246
    $region34: #{attention_block.1} parent=5 // pred_check_branch
      %249 = sbr.rel (%p247) target = $region36
    $region35: #{attention_block.1} parent=5 // pred_region
      // Predicated region
      $region37: #{attention_block.1} parent=35 // pred_check
        %p250 = pneg %p49
      $region38: #{attention_block.1} parent=35 // pred_check_branch
        %252 = sbr.rel (%p250) target = $region40
      $region39: #{attention_block.1} parent=35 // pred_region
        %s253 = smul.u32 2, %s23
        %p254 = scmp.lt.s32.totalorder %s22, 1
        %s255 = scalar_select %p254, %s22, 1
        %p256 = scmp.lt.s32.totalorder %s253, 1
        %s257 = scalar_select %p256, %s253, 1
        %s258 = smul.addr %s255, 2
        %s259 = sadd.s32 %s257, %s258
        %s260 = smul.addr %s259, 4
        %s261 = scalar_lea.vmem %s0, %s260
        %s262 = smul.u32 2, %s23
      $region40: #{attention_block.1} parent=35 // pred_fallthru
        _
      // Predicated region
      $region41: #{attention_block.1} parent=35 // pred_check
        %p263 = pneg %p77
      $region42: #{attention_block.1} parent=35 // pred_check_branch
        %265 = sbr.rel (%p263) target = $region44
      $region43: #{attention_block.1} parent=35 // pred_region
        %s266 = smul.u32 2, %s23
        %p267 = scmp.lt.s32.totalorder %s22, 1
        %s268 = scalar_select %p267, %s22, 1
        %p269 = scmp.lt.s32.totalorder %s266, 1
        %s270 = scalar_select %p269, %s266, 1
        %s271 = smul.addr %s268, 2
        %s272 = sadd.s32 %s270, %s271
        %s273 = smul.addr %s272, 4
        %s274 = scalar_lea.vmem %s1, %s273
        %s275 = smul.u32 2, %s23
      $region44: #{attention_block.1} parent=35 // pred_fallthru
        _
    $region36: #{attention_block.1} parent=5 // pred_fallthru
      _
    %p276 = scmp.le.s32.totalorder 1, %s15
    %p277 = scmp.lt.s32.totalorder %s15, 3
    %p278 = pnand %p276, %p277
    %p279 = pneg %p278
    // Predicated region
    $region45: #{attention_block.1} parent=5 // pred_check
      _
    $region46: #{attention_block.1} parent=5 // pred_check_branch
      %281 = sbr.rel (%p278) target = $region48
    $region47: #{attention_block.1} parent=5 // pred_region
      %s282 = ssub.s32 %s15, 1
      %s283 = smul.u32 2, %s25
      %p284 = scmp.lt.s32.totalorder %s24, 1
      %s285 = scalar_select %p284, %s24, 1
      %p286 = scmp.lt.s32.totalorder %s283, 1
      %s287 = scalar_select %p286, %s283, 1
      %s288 = smul.addr %s285, 2
      %s289 = sadd.s32 %s287, %s288
      %s290 = smul.addr %s289, 4
      %s291 = scalar_lea.vmem %s0, %s290
      %p292 = pneg %p55
      %p293 = pneg %p52
      %s294 = smul.u32 2, %s25
      %p295 = scmp.lt.s32.totalorder %s24, 1
      %s296 = scalar_select %p295, %s24, 1
      %p297 = scmp.lt.s32.totalorder %s294, 1
      %s298 = scalar_select %p297, %s294, 1
      %s299 = smul.addr %s296, 2
      %s300 = sadd.s32 %s298, %s299
      %s301 = smul.addr %s300, 4
      %s302 = scalar_lea.vmem %s1, %s301
      %p303 = pneg %p83
      %p304 = pneg %p80
      %p305 = pneg %p104
      %p306 = pneg %p101
      %p307 = pneg %p125
      %p308 = pneg %p122
      %p309 = pneg %p146
      %p310 = pneg %p143
      %p311 = pneg %p167
      %p312 = pneg %p164
      %p313 = pneg %p188
      %p314 = pneg %p185
      %p315 = pneg %p216
      %p316 = pneg %p213
      %s317 = smul.u32 2, %s25
      %p318 = scmp.lt.s32.totalorder %s24, 1
      %s319 = scalar_select %p318, %s24, 1
      %p320 = scmp.lt.s32.totalorder %s317, 1
      %s321 = scalar_select %p320, %s317, 1
      %s322 = smul.addr %s319, 2
      %s323 = sadd.s32 %s321, %s322
      %s324 = smul.addr %s323, 4
      %s325 = scalar_lea.vmem %s7, %s324
      %s326 = smul.u32 2, %s25
      %p327 = scmp.lt.s32.totalorder %s24, 1
      %s328 = scalar_select %p327, %s24, 1
      %p329 = scmp.lt.s32.totalorder %s326, 1
      %s330 = scalar_select %p329, %s326, 1
      %s331 = smul.addr %s328, 2
      %s332 = sadd.s32 %s330, %s331
      %s333 = smul.addr %s332, 4
      %s334 = scalar_lea.vmem %s0, %s333
      %s335 = smul.u32 2, %s25
      %s336 = smul.u32 2, %s25
      %p337 = scmp.lt.s32.totalorder %s24, 1
      %s338 = scalar_select %p337, %s24, 1
      %p339 = scmp.lt.s32.totalorder %s336, 1
      %s340 = scalar_select %p339, %s336, 1
      %s341 = smul.addr %s338, 2
      %s342 = sadd.s32 %s340, %s341
      %s343 = smul.addr %s342, 4
      %s344 = scalar_lea.vmem %s1, %s343
      %s345 = smul.u32 2, %s25
      %s346 = smul.u32 2, %s25
      %p347 = scmp.lt.s32.totalorder %s24, 1
      %s348 = scalar_select %p347, %s24, 1
      %p349 = scmp.lt.s32.totalorder %s346, 1
      %s350 = scalar_select %p349, %s346, 1
      %s351 = smul.addr %s348, 2
      %s352 = sadd.s32 %s350, %s351
      %s353 = smul.addr %s352, 4
      %s354 = scalar_lea.vmem %s7, %s353
      %s355 = smul.u32 2, %s25
      %v356 = vld [vmem:[%s334] sm:$0xff]
      %v357 = vld [vmem:[%s344] sm:$0xff]
      %v358 = vld [vmem:[%s2] sm:$0xff]
      %v359 = vld [vmem:[%s3] sm:$0xff]
      %361 = vst [vmem:[#allocation1] ss:$2 sm:$0xff] %v357
      %v362 = vld.sshfl [vmem:[#allocation1] sm:$0xff pattern:$0x75316420]
      %v363 = vld.sshfl [vmem:[#allocation1 + $0x8] sm:$0xff pattern:$0x75316420]
      %vm364 = vcmask 31744
      %v366 = vsel %vm364, %v359, 0
      %vm368 = vcmask 1043456
      %v369 = vsel %vm368, %v362, 0
      %v371 = vsel %vm368, %v363, 0
      %373 = vmatpush.msra.mxu0 0.0
      %374 = vmatpush.msra.mxu0 0.0
      %375 = vmatpush.msra.mxu0 0.0
      %376 = vmatpush.msra.mxu0 0.0
      %377 = vmatpush.msra.mxu0 0.0
      %378 = vmatpush.msra.mxu0 0.0
      %379 = vmatpush.msra.mxu0 0.0
      %380 = vmatpush.msra.mxu0 0.0
      %381 = vmatpush.msra.mxu0 0.0
      %382 = vmatpush.msra.mxu0 0.0
      %383 = vmatpush.msra.mxu0 0.0
      %384 = vmatpush.msra.mxu0 0.0
      %385 = vmatpush.msra.mxu0 0.0
      %386 = vmatpush.msra.mxu0 0.0
      %387 = vmatpush.msra.mxu0 0.0
      %388 = vmatpush.msra.mxu0 %v369
      %389 = vmatmul.f32.gmra.mxu0 %v366
      %v390 = vpop.f32.mrf.mxu0
      %v391 = vadd.f32 0.0, %v390
      %392 = vdwg.mxu0
      %393 = vmatpush.msra.mxu0 0.0
      %394 = vmatpush.msra.mxu0 0.0
      %395 = vmatpush.msra.mxu0 0.0
      %396 = vmatpush.msra.mxu0 0.0
      %397 = vmatpush.msra.mxu0 0.0
      %398 = vmatpush.msra.mxu0 0.0
      %399 = vmatpush.msra.mxu0 0.0
      %400 = vmatpush.msra.mxu0 0.0
      %401 = vmatpush.msra.mxu0 0.0
      %402 = vmatpush.msra.mxu0 0.0
      %403 = vmatpush.msra.mxu0 0.0
      %404 = vmatpush.msra.mxu0 0.0
      %405 = vmatpush.msra.mxu0 0.0
      %406 = vmatpush.msra.mxu0 0.0
      %407 = vmatpush.msra.mxu0 0.0
      %408 = vmatpush.msra.mxu0 %v371
      %409 = vmatmul.f32.gmra.mxu0 %v366
      %v410 = vpop.f32.mrf.mxu0
      %v411 = vadd.f32 0.0, %v410
      %412 = vdwg.mxu0
      %414 = vst [vmem:[#allocation1] ss:$2 sm:$0xff] %v356
      %v415 = vld.sshfl [vmem:[#allocation1] sm:$0xff pattern:$0x75316420]
      %v416 = vld.sshfl [vmem:[#allocation1 + $0x8] sm:$0xff pattern:$0x75316420]
      %v418 = vsel %vm364, %v358, 0
      %v420 = vsel %vm368, %v415, 0
      %v422 = vsel %vm368, %v416, 0
      %424 = vmatpush.msra.mxu0 0.0
      %425 = vmatpush.msra.mxu0 0.0
      %426 = vmatpush.msra.mxu0 0.0
      %427 = vmatpush.msra.mxu0 0.0
      %428 = vmatpush.msra.mxu0 0.0
      %429 = vmatpush.msra.mxu0 0.0
      %430 = vmatpush.msra.mxu0 0.0
      %431 = vmatpush.msra.mxu0 0.0
      %432 = vmatpush.msra.mxu0 0.0
      %433 = vmatpush.msra.mxu0 0.0
      %434 = vmatpush.msra.mxu0 0.0
      %435 = vmatpush.msra.mxu0 0.0
      %436 = vmatpush.msra.mxu0 0.0
      %437 = vmatpush.msra.mxu0 0.0
      %438 = vmatpush.msra.mxu0 0.0
      %439 = vmatpush.msra.mxu0 %v420
      %440 = vmatmul.f32.gmra.mxu0 %v418
      %v441 = vpop.f32.mrf.mxu0
      %v442 = vadd.f32 %v391, %v441
      %443 = vdwg.mxu0
      %444 = vmatpush.msra.mxu0 0.0
      %445 = vmatpush.msra.mxu0 0.0
      %446 = vmatpush.msra.mxu0 0.0
      %447 = vmatpush.msra.mxu0 0.0
      %448 = vmatpush.msra.mxu0 0.0
      %449 = vmatpush.msra.mxu0 0.0
      %450 = vmatpush.msra.mxu0 0.0
      %451 = vmatpush.msra.mxu0 0.0
      %452 = vmatpush.msra.mxu0 0.0
      %453 = vmatpush.msra.mxu0 0.0
      %454 = vmatpush.msra.mxu0 0.0
      %455 = vmatpush.msra.mxu0 0.0
      %456 = vmatpush.msra.mxu0 0.0
      %457 = vmatpush.msra.mxu0 0.0
      %458 = vmatpush.msra.mxu0 0.0
      %459 = vmatpush.msra.mxu0 %v422
      %460 = vmatmul.f32.gmra.mxu0 %v418
      %v461 = vpop.f32.mrf.mxu0
      %v462 = vadd.f32 %v411, %v461
      %463 = vdwg.mxu0
      %v464 = vld [vmem:[%s5] sm:$0xff]
      %466 = vset.pattern.permute.xlu0 0
      %467 = vperm.xlu0 %466, %v464
      %v468 = vpop.permute.xlu0 %467
      %v470 = vadd.f32 %v442, %v468
      %v471 = vadd.f32 %v462, %v468
      %v472 = vmax.f32 %v470, 0.0
      %v473 = vmax.f32 %v471, 0.0
      %v474 = vld [vmem:[%s4] sm:$0x1]
      %v475 = vld [vmem:[#allocation2] sm:$0x1]
      %477 = vset.pattern.permute.xlu0 0
      %478 = vperm.xlu0 %477, %v475
      %v479 = vpop.permute.xlu0 %478
      %v481 = vperm.slane %v479, 0
      %vm482 = vcmask 64512
      %v484 = vsel %vm482, %v474, 0
      %486 = vmatpush.msra.mxu0 0.0
      %487 = vmatpush.msra.mxu0 0.0
      %488 = vmatpush.msra.mxu0 0.0
      %489 = vmatpush.msra.mxu0 0.0
      %490 = vmatpush.msra.mxu0 0.0
      %491 = vmatpush.msra.mxu0 0.0
      %492 = vmatpush.msra.mxu0 0.0
      %493 = vmatpush.msra.mxu0 0.0
      %494 = vmatpush.msra.mxu0 0.0
      %495 = vmatpush.msra.mxu0 0.0
      %496 = vmatpush.msra.mxu0 0.0
      %497 = vmatpush.msra.mxu0 0.0
      %498 = vmatpush.msra.mxu0 0.0
      %499 = vmatpush.msra.mxu0 0.0
      %500 = vmatpush.msra.mxu0 0.0
      %501 = vmatpush.msra.mxu0 %v472
      %502 = vmatmul.f32.gmra.mxu0 %v484
      %v503 = vpop.f32.mrf.mxu0
      %v504 = vadd.f32 %v481, %v503
      %505 = vdwg.mxu0
      %506 = vmatpush.msra.mxu0 0.0
      %507 = vmatpush.msra.mxu0 0.0
      %508 = vmatpush.msra.mxu0 0.0
      %509 = vmatpush.msra.mxu0 0.0
      %510 = vmatpush.msra.mxu0 0.0
      %511 = vmatpush.msra.mxu0 0.0
      %512 = vmatpush.msra.mxu0 0.0
      %513 = vmatpush.msra.mxu0 0.0
      %514 = vmatpush.msra.mxu0 0.0
      %515 = vmatpush.msra.mxu0 0.0
      %516 = vmatpush.msra.mxu0 0.0
      %517 = vmatpush.msra.mxu0 0.0
      %518 = vmatpush.msra.mxu0 0.0
      %519 = vmatpush.msra.mxu0 0.0
      %520 = vmatpush.msra.mxu0 0.0
      %521 = vmatpush.msra.mxu0 %v473
      %522 = vmatmul.f32.gmra.mxu0 %v484
      %v523 = vpop.f32.mrf.mxu0
      %v524 = vadd.f32 %v481, %v523
      %525 = vdwg.mxu0
      %v526 = vxor.u32 %v504, 2147483648
      %v527 = vxor.u32 %v524, 2147483648
      %v528 = vmul.f32 %v526, 1.442695
      %v529 = vpow.pop %v528
      %v530 = vmul.f32 %v527, 1.442695
      %v531 = vpow.pop %v530
      %v532 = vadd.f32 %v529, 1.0
      %v533 = vadd.f32 %v531, 1.0
      %v534 = vrcp.pop %v532
      %v535 = vmul.f32 %v532, %v534
      %v536 = vsub.f32 1.0, %v535
      %v537 = vmul.f32 %v534, %v536
      %v538 = vadd.f32 %v534, %v537
      %vm539 = vweird.f32 %v532
      %vm540 = vweird.f32 %v534
      %vm541 = vmor %vm539, %vm540
      %v542 = vsel %vm541, %v534, %v538
      %v543 = vand.u32 2147483647, %v532
      %vm544 = vcmp.eq.f32.partialorder %v543, 8.507059e+37
      %v545 = vand.u32 %v532, 2147483648
      %v546 = vor.u32 1.1754944e-38, %v545
      %v547 = vsel %vm544, %v546, %v542
      %v548 = vmul.f32 1.0, %v547
      %v549 = vrcp.pop %v533
      %v550 = vmul.f32 %v533, %v549
      %v551 = vsub.f32 1.0, %v550
      %v552 = vmul.f32 %v549, %v551
      %v553 = vadd.f32 %v549, %v552
      %vm554 = vweird.f32 %v533
      %vm555 = vweird.f32 %v549
      %vm556 = vmor %vm554, %vm555
      %v557 = vsel %vm556, %v549, %v553
      %v558 = vand.u32 2147483647, %v533
      %vm559 = vcmp.eq.f32.partialorder %v558, 8.507059e+37
      %v560 = vand.u32 %v533, 2147483648
      %v561 = vor.u32 1.1754944e-38, %v560
      %v562 = vsel %vm559, %v561, %v557
      %v563 = vmul.f32 1.0, %v562
      %v564 = vperm.slane %v548, 0
      %v565 = vperm.slane %v563, 0
      %v568 = vrot.slane %v565, 4
      %v569 = vsel %vm368, %v564, %v568
      %v571 = vmul.f32 %v357, %v569
      %572 = vst [vmem:[%s354] sm:$0xff] %v571
      %s573 = smul.u32 2, %s25
      %p574 = scmp.lt.s32.totalorder %s24, 1
      %s575 = scalar_select %p574, %s24, 1
      %p576 = scmp.lt.s32.totalorder %s573, 1
      %s577 = scalar_select %p576, %s573, 1
      %s578 = smul.addr %s575, 2
      %s579 = sadd.s32 %s577, %s578
      %s580 = smul.addr %s579, 4
      %s581 = scalar_lea.vmem %s7, %s580
      // Predicated region
      $region49: #{attention_block.1} parent=47 // pred_check
        %p582 = pneg %p213
      $region50: #{attention_block.1} parent=47 // pred_check_branch
        %584 = sbr.rel (%p582) target = $region52
      $region51: #{attention_block.1} parent=47 // pred_region
        %s585 = smul.u32 2, %s25
      $region52: #{attention_block.1} parent=47 // pred_fallthru
        _
    $region48: #{attention_block.1} parent=5 // pred_fallthru
      _
    %p586 = scmp.le.s32.totalorder 2, %s15
    // Predicated region
    $region53: #{attention_block.1} parent=5 // pred_check
      %p587 = pneg %p586
    $region54: #{attention_block.1} parent=5 // pred_check_branch
      %589 = sbr.rel (%p587) target = $region56
    $region55: #{attention_block.1} parent=5 // pred_region
      %s590 = ssub.s32 %s15, 2
      // Predicated region
      $region57: #{attention_block.1} parent=55 // pred_check
        %p591 = pneg %p219
      $region58: #{attention_block.1} parent=55 // pred_check_branch
        %593 = sbr.rel (%p591) target = $region60
      $region59: #{attention_block.1} parent=55 // pred_region
        %s594 = smul.u32 2, %s27
        %p595 = scmp.lt.s32.totalorder %s26, 1
        %s596 = scalar_select %p595, %s26, 1
        %p597 = scmp.lt.s32.totalorder %s594, 1
        %s598 = scalar_select %p597, %s594, 1
        %s599 = smul.addr %s596, 2
        %s600 = sadd.s32 %s598, %s599
        %s601 = smul.addr %s600, 4
        %s602 = scalar_lea.vmem %s7, %s601
      $region60: #{attention_block.1} parent=55 // pred_fallthru
        _
    $region56: #{attention_block.1} parent=5 // pred_fallthru
      _
  $region6: #{attention_block.1} parent=0 // loop_footer
    %s19 = sadd.s32 1, %s15
  $region7: #{attention_block.1} parent=0 // loop_footer_branch
    %14 = sbr.rel target = $region3
  $region8: #{attention_block.1} parent=0 // loop_exit
    _

</llo_original>
